<compile_context>
chip_gen: v5e
topology: v5e:2x2
jax: 0.10.0
libtpu: 0.0.40
codegen_flags: <defaults>
</compile_context>

<pallas_src>
import functools

import jax
import jax.numpy as jnp
from jax.experimental import pallas as pl
from jax.experimental.pallas import tpu as pltpu


def _coral_gram_kernel(src_ref, tgt_ref, gss_ref, gtt_ref, gst_ref, *,
                       d, tile, tiles_per_split, needs_mask):
    k = pl.program_id(1)

    # P3 accumulator init: output blocks are VMEM-resident across the inner
    # ("arbitrary") D-tile axis; zero on the first step of each split,
    # accumulate in place afterwards.  Writeback to HBM happens once per split.
    @pl.when(k == 0)
    def _():
        gss_ref[...] = jnp.zeros_like(gss_ref)
        gtt_ref[...] = jnp.zeros_like(gtt_ref)
        gst_ref[...] = jnp.zeros_like(gst_ref)

    # Stream tiles in their stored dtype; upcast once in VMEM.
    xs = src_ref[...].astype(jnp.float32)
    xt = tgt_ref[...].astype(jnp.float32)

    if needs_mask:
        # Tail / fully-out-of-range tiles: zero invalid feature columns BEFORE
        # centering and the matmuls (zero columns have zero mean and contribute
        # nothing to the Grams, so this is exact).
        c = pl.program_id(0)
        t = c * tiles_per_split + k                 # global D-tile index
        rem = d - t * tile                          # <= 0 for fully OOB tiles
        col = jax.lax.broadcasted_iota(jnp.int32, xs.shape, 1)
        valid = col < rem
        xs = jnp.where(valid, xs, 0.0)
        xt = jnp.where(valid, xt, 0.0)

    # Center exactly like torch: xm = mean(x, 0, keepdim=True) - x.  Each
    # feature column lives entirely inside one tile, so the per-tile column
    # mean is the full column mean; every tile is loaded/centered exactly once.
    xs = jnp.mean(xs, axis=0, keepdims=True) - xs
    xt = jnp.mean(xt, axis=0, keepdims=True) - xt

    # Contract over the feature tile (last axis of both operands) -> (N, N)
    # Gram updates on the MXU.  The 1/N covariance scaling and the Frobenius
    # combination are hoisted to the wrapper.
    dims = (((1,), (1,)), ((), ()))
    gss_ref[...] += jax.lax.dot_general(xs, xs, dims,
                                        preferred_element_type=jnp.float32)
    gtt_ref[...] += jax.lax.dot_general(xt, xt, dims,
                                        preferred_element_type=jnp.float32)
    gst_ref[...] += jax.lax.dot_general(xs, xt, dims,
                                        preferred_element_type=jnp.float32)


def coral(source, target, *, tile_d=2048, num_splits=2):
    """Pallas CORAL loss.  Accepts (N, D) or NCHW (N, C, H, W) inputs."""
    if source.ndim == 4:
        n0 = source.shape[0]
        source = source.reshape(n0, -1)
        target = target.reshape(n0, -1)
    assert source.ndim == 2 and source.shape == target.shape
    n, d = source.shape
    itemsize = jnp.dtype(source.dtype).itemsize

    # ---- choose the streamed D tile -------------------------------------
    # Bigger tiles amortize the ~0.35us/grid-step overhead and push the DMAs
    # toward the HBM roofline, but 2 inputs x 2 pipeline buffers must stay
    # well inside VMEM (v7x has 64 MiB physical vs 128 MiB on v5e/v6e) ->
    # cap the input double-buffers at ~16 MiB.
    input_budget = 16 * 1024 * 1024
    max_tile = max(128, (input_budget // (4 * n * itemsize)) // 128 * 128)
    tile_d = max(128, (min(tile_d, max_tile) // 128) * 128)

    if d <= tile_d:
        tile = d            # full-extent block: no lane-alignment constraint
        num_tiles = 1
    else:
        tile = tile_d       # multiple of 128 by construction
        num_tiles = pl.cdiv(d, tile)

    # ---- split the D reduction across (up to) two cores ------------------
    # Leading "parallel" axis lets v7x shard the reduction over its two
    # TensorCores (each with its own accumulators); on v5e/v6e (single TC) it
    # degenerates to a cheap outer loop.
    num_splits = max(1, min(num_splits, num_tiles))
    tiles_per_split = pl.cdiv(num_tiles, num_splits)
    needs_mask = (num_splits * tiles_per_split * tile) != d

    def in_index(c, k):
        t = c * tiles_per_split + k
        if needs_mask:
            t = jnp.minimum(t, num_tiles - 1)   # keep DMA window in-bounds
        return (0, t)

    in_spec = pl.BlockSpec((n, tile), in_index)
    # Same output block for every inner step -> VMEM-resident accumulator.
    out_spec = pl.BlockSpec((None, n, n), lambda c, k: (c, 0, 0))
    out_shape = jax.ShapeDtypeStruct((num_splits, n, n), jnp.float32)

    vmem_need = (2 * 2 * n * tile * itemsize      # 2 inputs x double buffers
                 + 3 * 2 * n * n * 4)             # 3 resident (N, N) f32 accums
    vmem_limit = int(min(max(vmem_need + (8 << 20), 32 << 20), 112 << 20))

    kernel = functools.partial(
        _coral_gram_kernel, d=d, tile=tile,
        tiles_per_split=tiles_per_split, needs_mask=needs_mask)

    gss_p, gtt_p, gst_p = pl.pallas_call(
        kernel,
        out_shape=(out_shape, out_shape, out_shape),
        grid=(num_splits, tiles_per_split),
        in_specs=[in_spec, in_spec],
        out_specs=(out_spec, out_spec, out_spec),
        compiler_params=pltpu.CompilerParams(
            dimension_semantics=("parallel", "arbitrary"),
            vmem_limit_bytes=vmem_limit),
    )(source, target)

    # Tiny cross-split sums + final combination in the wrapper.
    g_ss = jnp.sum(gss_p, axis=0)      # A A^T   (A = centered source)
    g_tt = jnp.sum(gtt_p, axis=0)      # B B^T   (B = centered target)
    g_st = jnp.sum(gst_p, axis=0)      # A B^T
    # N^2 * ||C_t - C_s||_F^2 = ||BB^T||^2 + ||AA^T||^2 - 2||AB^T||^2
    # NOTE: exact algebraically, but cancels in f32 when C_s ~= C_t; the
    # clamp also flattens the sqrt gradient at 0.  Documented tolerance.
    sq = (jnp.sum(g_tt * g_tt) + jnp.sum(g_ss * g_ss)
          - 2.0 * jnp.sum(g_st * g_st))
    return jnp.sqrt(jnp.maximum(sq, 0.0)) / n


def coral_ref(source, target):
    """Pure-JAX reference matching the PyTorch module (direct D x D path)."""
    if source.ndim == 4:
        n0 = source.shape[0]
        source = source.reshape(n0, -1)
        target = target.reshape(n0, -1)
    source = source.astype(jnp.float32)
    target = target.astype(jnp.float32)
    xm = jnp.mean(source, axis=0, keepdims=True) - source
    xc = xm.T @ xm / source.shape[0]
    xmt = jnp.mean(target, axis=0, keepdims=True) - target
    xct = xmt.T @ xmt / source.shape[0]
    return jnp.sqrt(jnp.sum((xct - xc) ** 2))


if __name__ == "__main__":
    key = jax.random.PRNGKey(0)
    k1, k2, k3, k4 = jax.random.split(key, 4)

    # NCHW conv-activation style inputs (N=2, C=4, H=W=16)  ->  D = 1024.
    source = jax.random.normal(k1, (2, 4, 16, 16), dtype=jnp.float32)
    target = 0.5 * jax.random.normal(k2, (2, 4, 16, 16), dtype=jnp.float32) + 0.1

    out = coral(source, target)
    jax.block_until_ready(out)
    ref = coral_ref(source, target)
    # Two mathematically equivalent f32 algorithms (Gram expansion vs direct
    # DxD difference) -> small tolerance.
    assert jnp.allclose(out, ref, rtol=1e-3, atol=1e-3), (out, ref)

    # Exercise the multi-tile / tail-mask / 2-split path:
    # D = 1000 with tile 256 -> 2 splits x 2 tiles, masked partial last tile.
    src2 = jax.random.normal(k3, (8, 1000), dtype=jnp.float32)
    tgt2 = 0.7 * jax.random.normal(k4, (8, 1000), dtype=jnp.float32) - 0.2
    out2 = coral(src2, tgt2, tile_d=256)
    jax.block_until_ready(out2)
    ref2 = coral_ref(src2, tgt2)
    assert jnp.allclose(out2, ref2, rtol=1e-3, atol=1e-3), (out2, ref2)

    print("KERNEL_OK")
</pallas_src>

<mosaic_0001>
module attributes {stable_mosaic.version = 11 : i64} {
  func.func @_coral_gram_kernel(%arg0: i32, %arg1: i32, %arg2: memref<2x1024xf32, #tpu.memory_space<vmem>>, %arg3: memref<2x1024xf32, #tpu.memory_space<vmem>>, %arg4: memref<1x2x2xf32, #tpu.memory_space<vmem>>, %arg5: memref<1x2x2xf32, #tpu.memory_space<vmem>>, %arg6: memref<1x2x2xf32, #tpu.memory_space<vmem>>) attributes {dimension_semantics = [#tpu.dimension_semantics<parallel>, #tpu.dimension_semantics<arbitrary>], iteration_bounds = array<i64: 1, 1>, scalar_prefetch = 0 : i64, scratch_operands = 0 : i64, tpu.core_type = #tpu.core_type<tc>, window_params = [{transform_indices = @transform_0, window_bounds = array<i64: 2, 1024>}, {transform_indices = @transform_1, window_bounds = array<i64: 2, 1024>}, {transform_indices = @transform_2, window_bounds = array<i64: 1, 2, 2>}, {transform_indices = @transform_3, window_bounds = array<i64: 1, 2, 2>}, {transform_indices = @transform_4, window_bounds = array<i64: 1, 2, 2>}]} {
    %c0_i32 = arith.constant 0 : i32
    %0 = arith.cmpi eq, %arg1, %c0_i32 : i32
    %1 = arith.extui %0 : i1 to i32
    %c0_i32_0 = arith.constant 0 : i32
    %2 = arith.cmpi ne, %1, %c0_i32_0 : i32
    scf.if %2 {
      %cst_28 = arith.constant 0.000000e+00 : f32
      %38 = vector.broadcast %cst_28 : f32 to vector<2x2xf32>
      %c0_29 = arith.constant 0 : index
      %c0_30 = arith.constant 0 : index
      %c0_31 = arith.constant 0 : index
      %39 = vector.load %arg4[%c0_29, %c0_30, %c0_31] : memref<1x2x2xf32, #tpu.memory_space<vmem>>, vector<1x2x2xf32>
      %40 = vector.shape_cast %39 : vector<1x2x2xf32> to vector<2x2xf32>
      %41 = vector.shape_cast %38 : vector<2x2xf32> to vector<1x2x2xf32>
      tpu.vector_store %arg4[%c0_29, %c0_30, %c0_31], %41 {strides = array<i32>} : memref<1x2x2xf32, #tpu.memory_space<vmem>>, vector<1x2x2xf32>,
      %cst_32 = arith.constant 0.000000e+00 : f32
      %42 = vector.broadcast %cst_32 : f32 to vector<2x2xf32>
      %c0_33 = arith.constant 0 : index
      %c0_34 = arith.constant 0 : index
      %c0_35 = arith.constant 0 : index
      %43 = vector.load %arg5[%c0_33, %c0_34, %c0_35] : memref<1x2x2xf32, #tpu.memory_space<vmem>>, vector<1x2x2xf32>
      %44 = vector.shape_cast %43 : vector<1x2x2xf32> to vector<2x2xf32>
      %45 = vector.shape_cast %42 : vector<2x2xf32> to vector<1x2x2xf32>
      tpu.vector_store %arg5[%c0_33, %c0_34, %c0_35], %45 {strides = array<i32>} : memref<1x2x2xf32, #tpu.memory_space<vmem>>, vector<1x2x2xf32>,
      %cst_36 = arith.constant 0.000000e+00 : f32
      %46 = vector.broadcast %cst_36 : f32 to vector<2x2xf32>
      %c0_37 = arith.constant 0 : index
      %c0_38 = arith.constant 0 : index
      %c0_39 = arith.constant 0 : index
      %47 = vector.load %arg6[%c0_37, %c0_38, %c0_39] : memref<1x2x2xf32, #tpu.memory_space<vmem>>, vector<1x2x2xf32>
      %48 = vector.shape_cast %47 : vector<1x2x2xf32> to vector<2x2xf32>
      %49 = vector.shape_cast %46 : vector<2x2xf32> to vector<1x2x2xf32>
      tpu.vector_store %arg6[%c0_37, %c0_38, %c0_39], %49 {strides = array<i32>} : memref<1x2x2xf32, #tpu.memory_space<vmem>>, vector<1x2x2xf32>,
    } else {
    }
    %c0 = arith.constant 0 : index
    %c0_1 = arith.constant 0 : index
    %3 = vector.load %arg2[%c0, %c0_1] : memref<2x1024xf32, #tpu.memory_space<vmem>>, vector<2x1024xf32>
    %c0_2 = arith.constant 0 : index
    %c0_3 = arith.constant 0 : index
    %4 = vector.load %arg3[%c0_2, %c0_3] : memref<2x1024xf32, #tpu.memory_space<vmem>>, vector<2x1024xf32>
    %cst = arith.constant dense<0.000000e+00> : vector<1024xf32>
    %5 = vector.multi_reduction <add>, %3, %cst [0] : vector<2x1024xf32> to vector<1024xf32>
    %6 = vector.shape_cast %5 : vector<1024xf32> to vector<1x1024xf32>
    %cst_4 = arith.constant 2.000000e+00 : f32
    %7 = vector.broadcast %cst_4 : f32 to vector<1x1024xf32>
    %8 = arith.divf %6, %7 : vector<1x1024xf32>
    %9 = vector.broadcast %8 : vector<1x1024xf32> to vector<2x1024xf32>
    %10 = arith.subf %9, %3 : vector<2x1024xf32>
    %cst_5 = arith.constant dense<0.000000e+00> : vector<1024xf32>
    %11 = vector.multi_reduction <add>, %4, %cst_5 [0] : vector<2x1024xf32> to vector<1024xf32>
    %12 = vector.shape_cast %11 : vector<1024xf32> to vector<1x1024xf32>
    %cst_6 = arith.constant 2.000000e+00 : f32
    %13 = vector.broadcast %cst_6 : f32 to vector<1x1024xf32>
    %14 = arith.divf %12, %13 : vector<1x1024xf32>
    %15 = vector.broadcast %14 : vector<1x1024xf32> to vector<2x1024xf32>
    %16 = arith.subf %15, %4 : vector<2x1024xf32>
    %c0_7 = arith.constant 0 : index
    %c0_8 = arith.constant 0 : index
    %c0_9 = arith.constant 0 : index
    %17 = vector.load %arg4[%c0_7, %c0_8, %c0_9] : memref<1x2x2xf32, #tpu.memory_space<vmem>>, vector<1x2x2xf32>
    %18 = vector.shape_cast %17 : vector<1x2x2xf32> to vector<2x2xf32>
    %cst_10 = arith.constant dense<0.000000e+00> : vector<2x2xf32>
    %19 = tpu.matmul %10, %10, %cst_10 {dimension_numbers = #tpu.dot_dimension_numbers<[1], [1], [0], [0], [0, 0, 1, 0], [], []>} : vector<2x1024xf32>, vector<2x1024xf32>, vector<2x2xf32> -> vector<2x2xf32>
    %20 = arith.addf %18, %19 : vector<2x2xf32>
    %c0_11 = arith.constant 0 : index
    %c0_12 = arith.constant 0 : index
    %c0_13 = arith.constant 0 : index
    %21 = vector.load %arg4[%c0_11, %c0_12, %c0_13] : memref<1x2x2xf32, #tpu.memory_space<vmem>>, vector<1x2x2xf32>
    %22 = vector.shape_cast %21 : vector<1x2x2xf32> to vector<2x2xf32>
    %23 = vector.shape_cast %20 : vector<2x2xf32> to vector<1x2x2xf32>
    tpu.vector_store %arg4[%c0_11, %c0_12, %c0_13], %23 {strides = array<i32>} : memref<1x2x2xf32, #tpu.memory_space<vmem>>, vector<1x2x2xf32>,
    %c0_14 = arith.constant 0 : index
    %c0_15 = arith.constant 0 : index
    %c0_16 = arith.constant 0 : index
    %24 = vector.load %arg5[%c0_14, %c0_15, %c0_16] : memref<1x2x2xf32, #tpu.memory_space<vmem>>, vector<1x2x2xf32>
    %25 = vector.shape_cast %24 : vector<1x2x2xf32> to vector<2x2xf32>
    %cst_17 = arith.constant dense<0.000000e+00> : vector<2x2xf32>
    %26 = tpu.matmul %16, %16, %cst_17 {dimension_numbers = #tpu.dot_dimension_numbers<[1], [1], [0], [0], [0, 0, 1, 0], [], []>} : vector<2x1024xf32>, vector<2x1024xf32>, vector<2x2xf32> -> vector<2x2xf32>
    %27 = arith.addf %25, %26 : vector<2x2xf32>
    %c0_18 = arith.constant 0 : index
    %c0_19 = arith.constant 0 : index
    %c0_20 = arith.constant 0 : index
    %28 = vector.load %arg5[%c0_18, %c0_19, %c0_20] : memref<1x2x2xf32, #tpu.memory_space<vmem>>, vector<1x2x2xf32>
    %29 = vector.shape_cast %28 : vector<1x2x2xf32> to vector<2x2xf32>
    %30 = vector.shape_cast %27 : vector<2x2xf32> to vector<1x2x2xf32>
    tpu.vector_store %arg5[%c0_18, %c0_19, %c0_20], %30 {strides = array<i32>} : memref<1x2x2xf32, #tpu.memory_space<vmem>>, vector<1x2x2xf32>,
    %c0_21 = arith.constant 0 : index
    %c0_22 = arith.constant 0 : index
    %c0_23 = arith.constant 0 : index
    %31 = vector.load %arg6[%c0_21, %c0_22, %c0_23] : memref<1x2x2xf32, #tpu.memory_space<vmem>>, vector<1x2x2xf32>
    %32 = vector.shape_cast %31 : vector<1x2x2xf32> to vector<2x2xf32>
    %cst_24 = arith.constant dense<0.000000e+00> : vector<2x2xf32>
    %33 = tpu.matmul %10, %16, %cst_24 {dimension_numbers = #tpu.dot_dimension_numbers<[1], [1], [0], [0], [0, 0, 1, 0], [], []>} : vector<2x1024xf32>, vector<2x1024xf32>, vector<2x2xf32> -> vector<2x2xf32>
    %34 = arith.addf %32, %33 : vector<2x2xf32>
    %c0_25 = arith.constant 0 : index
    %c0_26 = arith.constant 0 : index
    %c0_27 = arith.constant 0 : index
    %35 = vector.load %arg6[%c0_25, %c0_26, %c0_27] : memref<1x2x2xf32, #tpu.memory_space<vmem>>, vector<1x2x2xf32>
    %36 = vector.shape_cast %35 : vector<1x2x2xf32> to vector<2x2xf32>
    %37 = vector.shape_cast %34 : vector<2x2xf32> to vector<1x2x2xf32>
    tpu.vector_store %arg6[%c0_25, %c0_26, %c0_27], %37 {strides = array<i32>} : memref<1x2x2xf32, #tpu.memory_space<vmem>>, vector<1x2x2xf32>,
    return
  }
  func.func @transform_0(%arg0: i32, %arg1: i32) -> (i32, i32) {
    %c1_i32 = arith.constant 1 : i32
    %0 = arith.muli %arg0, %c1_i32 : i32
    %1 = arith.addi %0, %arg1 : i32
    %c0_i32 = arith.constant 0 : i32
    %c0_i32_0 = arith.constant 0 : i32
    return %c0_i32, %1 : i32, i32
  }
  func.func @transform_1(%arg0: i32, %arg1: i32) -> (i32, i32) {
    %c1_i32 = arith.constant 1 : i32
    %0 = arith.muli %arg0, %c1_i32 : i32
    %1 = arith.addi %0, %arg1 : i32
    %c0_i32 = arith.constant 0 : i32
    %c0_i32_0 = arith.constant 0 : i32
    return %c0_i32, %1 : i32, i32
  }
  func.func @transform_2(%arg0: i32, %arg1: i32) -> (i32, i32, i32) {
    %c0_i32 = arith.constant 0 : i32
    %c0_i32_0 = arith.constant 0 : i32
    %c0_i32_1 = arith.constant 0 : i32
    return %arg0, %c0_i32, %c0_i32_0 : i32, i32, i32
  }
  func.func @transform_3(%arg0: i32, %arg1: i32) -> (i32, i32, i32) {
    %c0_i32 = arith.constant 0 : i32
    %c0_i32_0 = arith.constant 0 : i32
    %c0_i32_1 = arith.constant 0 : i32
    return %arg0, %c0_i32, %c0_i32_0 : i32, i32, i32
  }
  func.func @transform_4(%arg0: i32, %arg1: i32) -> (i32, i32, i32) {
    %c0_i32 = arith.constant 0 : i32
    %c0_i32_0 = arith.constant 0 : i32
    %c0_i32_1 = arith.constant 0 : i32
    return %arg0, %c0_i32, %c0_i32_0 : i32, i32, i32
  }
}

</mosaic_0001>

<llo_original>
// kernel: tpu_custom_call.1
$region0: #{tpu_custom_call.1}
  #allocation0 [shape = 'u32[]', space=smem, size = 0x4, offset = 0x4, fixed_abs, tag = 'smem constant byte address 0x4 - core index']
  #allocation1 [shape = 'u32[72,128]{1,0:T(1,128)}', space=vmem, size = 0x9000, scoped, tag = 'internal scratch']
  %s0 = inlined_call_operand.hbm [shape: f32[2,1024], index: 0, kind: input, shape index: {}]
  %s1 = inlined_call_operand.hbm [shape: f32[2,1024], index: 1, kind: input, shape index: {}]
  %s2 = inlined_call_operand.hbm [shape: f32[1,2,2], index: 2, kind: output, shape index: {0}]
  %s3 = inlined_call_operand.hbm [shape: f32[1,2,2], index: 3, kind: output, shape index: {1}]
  %s4 = inlined_call_operand.hbm [shape: f32[1,2,2], index: 4, kind: output, shape index: {2}]
  %5 = xla_tuple %s2, %s3, %s4
  %s6 = sld [smem:[#allocation0]]
  $region46: #{tpu_custom_call.1} parent=0
    _
  %s8 = ssub.s32 1, %s6
  %s9 = scalar_select 0, %s8, %s6
  $region1: #{tpu_custom_call.1} parent=0
    #allocation2 [shape = 'u8[8192]{0}', space=vmem, size = 0x2000, scoped, tag = 'input window, operand 0, single buffered']
    #allocation3 [shape = 's32[1]{0}', space=sflag, size = 0x4, scoped, tag = 'scoped memory for tpu_custom_call.1']
    #allocation4 [shape = 's32[1]{0}', space=sflag, size = 0x4, scoped, tag = 'scoped memory for tpu_custom_call.1']
    #allocation5 [shape = 'u8[8192]{0}', space=vmem, size = 0x2000, scoped, tag = 'input window, operand 1, single buffered']
    #allocation6 [shape = 's32[1]{0}', space=sflag, size = 0x4, scoped, tag = 'scoped memory for tpu_custom_call.1']
    #allocation7 [shape = 'u8[1024]{0}', space=vmem, size = 0x400, scoped, tag = 'output window, operand 0, single buffered']
    #allocation8 [shape = 'u8[1024]{0}', space=vmem, size = 0x400, scoped, tag = 'output window, operand 1, single buffered']
    #allocation9 [shape = 's32[1]{0}', space=sflag, size = 0x4, scoped, tag = 'scoped memory for tpu_custom_call.1']
    #allocation10 [shape = 'u8[1024]{0}', space=vmem, size = 0x400, scoped, tag = 'output window, operand 2, single buffered']
    %10 = vsyncpa [#allocation3], 0
    %11 = vsyncpa [#allocation6], 0
    %12 = vsyncpa [#allocation4], 0
    %13 = vsyncpa [#allocation9], 0
    // Predicated region
    $region2: #{tpu_custom_call.1} parent=1 // pred_check
      _
    $region3: #{tpu_custom_call.1} parent=1 // pred_check_branch
      %15 = sbr.rel (0) target = $region5
    $region4: #{tpu_custom_call.1} parent=1 // pred_region
      %s16 = sadd.s32 0, 0
      %s17 = smul.u32 8, %s16
      %19 = vsyncadd [#allocation3], 0
      %s20 = smul.addr %s17, 2
      %s21 = scalar_lea.hbm %s0, %s20
      %s23 = sshll.u32 %s21, 4
      %s24 = int_to_ptr.hbm [resolvable:$true] %s23
      %s25 = sshll.u32 [#allocation2], 4
      %s26 = int_to_ptr.vmem [resolvable:$true] %s25
      %28 = dma.hbm_to_vmem [thread:$0]  %s24, 256, %s26, [#allocation3]
    $region5: #{tpu_custom_call.1} parent=1 // pred_fallthru
      _
    // Predicated region
    $region6: #{tpu_custom_call.1} parent=1 // pred_check
      _
    $region7: #{tpu_custom_call.1} parent=1 // pred_check_branch
      %30 = sbr.rel (0) target = $region9
    $region8: #{tpu_custom_call.1} parent=1 // pred_region
      %s31 = sadd.s32 0, 0
      %s32 = smul.u32 8, %s31
      %34 = vsyncadd [#allocation6], 0
      %s35 = smul.addr %s32, 2
      %s36 = scalar_lea.hbm %s1, %s35
      %s38 = sshll.u32 %s36, 4
      %s39 = int_to_ptr.hbm [resolvable:$true] %s38
      %s40 = sshll.u32 [#allocation5], 4
      %s41 = int_to_ptr.vmem [resolvable:$true] %s40
      %43 = dma.hbm_to_vmem [thread:$0]  %s39, 256, %s41, [#allocation6]
    $region9: #{tpu_custom_call.1} parent=1 // pred_fallthru
      _
    // Predicated region
    $region10: #{tpu_custom_call.1} parent=1 // pred_check
      _
    $region11: #{tpu_custom_call.1} parent=1 // pred_check_branch
      %45 = sbr.rel (0) target = $region13
    $region12: #{tpu_custom_call.1} parent=1 // pred_region
      %47 = dma.done [#allocation3], 256
    $region13: #{tpu_custom_call.1} parent=1 // pred_fallthru
      _
    // Predicated region
    $region14: #{tpu_custom_call.1} parent=1 // pred_check
      _
    $region15: #{tpu_custom_call.1} parent=1 // pred_check_branch
      %49 = sbr.rel (0) target = $region17
    $region16: #{tpu_custom_call.1} parent=1 // pred_region
      %51 = dma.done [#allocation6], 256
    $region17: #{tpu_custom_call.1} parent=1 // pred_fallthru
      _
    %s52 = sadd.s32 0, 0
    %s53 = smul.u32 8, %s52
    %s54 = sadd.s32 0, 0
    %s55 = smul.u32 8, %s54
    %p56 = scmp.eq.s32.totalorder 0, 0
    // Predicated region
    $region18: #{tpu_custom_call.1} parent=1 // pred_check
      %p57 = pneg %p56
    $region19: #{tpu_custom_call.1} parent=1 // pred_check_branch
      %59 = sbr.rel (%p57) target = $region21
    $region20: #{tpu_custom_call.1} parent=1 // pred_region
      %vm60 = vcmask 9216
      %61 = vst.msk [vmem:[#allocation7] sm:$0x3] %vm60, 0.0
      %62 = vst.msk [vmem:[#allocation8] sm:$0x3] %vm60, 0.0
      %63 = vst.msk [vmem:[#allocation10] sm:$0x3] %vm60, 0.0
    $region21: #{tpu_custom_call.1} parent=1 // pred_fallthru
      _
    %v64 = vld [vmem:[#allocation2] sm:$0xff]
    %v65 = vld [vmem:[#allocation2 + $0x8] sm:$0xff]
    %v66 = vld [vmem:[#allocation5] sm:$0xff]
    %v67 = vld [vmem:[#allocation5 + $0x8] sm:$0xff]
    %70 = vst [vmem:[#allocation1] ss:$4 sm:$0xff] %v64
    %s71 = scalar_lea.vmem [#allocation1], 32
    %72 = vst [vmem:[%s71] ss:$4 sm:$0xff] %v65
    %v73 = vld.sshfl [vmem:[#allocation1] sm:$0xff pattern:$0x73625140]
    %v74 = vld.sshfl [vmem:[#allocation1 + $0x8] sm:$0xff pattern:$0x73625140]
    %v75 = vld.sshfl [vmem:[#allocation1 + $0x10] sm:$0xff pattern:$0x73625140]
    %v76 = vld.sshfl [vmem:[#allocation1 + $0x18] sm:$0xff pattern:$0x73625140]
    %v77 = vld.sshfl [vmem:[#allocation1 + $0x20] sm:$0xff pattern:$0x73625140]
    %v78 = vld.sshfl [vmem:[#allocation1 + $0x28] sm:$0xff pattern:$0x73625140]
    %v79 = vld.sshfl [vmem:[#allocation1 + $0x30] sm:$0xff pattern:$0x73625140]
    %v80 = vld.sshfl [vmem:[#allocation1 + $0x38] sm:$0xff pattern:$0x73625140]
    %vm89 = vcmask 1041408
    %v90 = vsel %vm89, %v73, 0.0
    %v91 = vrot.slane %v90, 4
    %v92 = vadd.f32 %v90, %v91
    %v93 = vrot.slane %v92, 2
    %v94 = vadd.f32 %v92, %v93
    %v95 = vrot.slane %v94, 1
    %v96 = vadd.f32 %v94, %v95
    %v97 = vsel %vm89, %v74, 0.0
    %v98 = vrot.slane %v97, 4
    %v99 = vadd.f32 %v97, %v98
    %v100 = vrot.slane %v99, 2
    %v101 = vadd.f32 %v99, %v100
    %v102 = vrot.slane %v101, 1
    %v103 = vadd.f32 %v101, %v102
    %v104 = vsel %vm89, %v75, 0.0
    %v105 = vrot.slane %v104, 4
    %v106 = vadd.f32 %v104, %v105
    %v107 = vrot.slane %v106, 2
    %v108 = vadd.f32 %v106, %v107
    %v109 = vrot.slane %v108, 1
    %v110 = vadd.f32 %v108, %v109
    %v111 = vsel %vm89, %v76, 0.0
    %v112 = vrot.slane %v111, 4
    %v113 = vadd.f32 %v111, %v112
    %v114 = vrot.slane %v113, 2
    %v115 = vadd.f32 %v113, %v114
    %v116 = vrot.slane %v115, 1
    %v117 = vadd.f32 %v115, %v116
    %v118 = vsel %vm89, %v77, 0.0
    %v119 = vrot.slane %v118, 4
    %v120 = vadd.f32 %v118, %v119
    %v121 = vrot.slane %v120, 2
    %v122 = vadd.f32 %v120, %v121
    %v123 = vrot.slane %v122, 1
    %v124 = vadd.f32 %v122, %v123
    %v125 = vsel %vm89, %v78, 0.0
    %v126 = vrot.slane %v125, 4
    %v127 = vadd.f32 %v125, %v126
    %v128 = vrot.slane %v127, 2
    %v129 = vadd.f32 %v127, %v128
    %v130 = vrot.slane %v129, 1
    %v131 = vadd.f32 %v129, %v130
    %v132 = vsel %vm89, %v79, 0.0
    %v133 = vrot.slane %v132, 4
    %v134 = vadd.f32 %v132, %v133
    %v135 = vrot.slane %v134, 2
    %v136 = vadd.f32 %v134, %v135
    %v137 = vrot.slane %v136, 1
    %v138 = vadd.f32 %v136, %v137
    %v139 = vsel %vm89, %v80, 0.0
    %v140 = vrot.slane %v139, 4
    %v141 = vadd.f32 %v139, %v140
    %v142 = vrot.slane %v141, 2
    %v143 = vadd.f32 %v141, %v142
    %v144 = vrot.slane %v143, 1
    %v145 = vadd.f32 %v143, %v144
    %v146 = vrcp.pop 2.0
    %v147 = vmul.f32 2.0, %v146
    %v148 = vsub.f32 1.0, %v147
    %v149 = vmul.f32 %v146, %v148
    %v150 = vadd.f32 %v146, %v149
    %vm151 = vweird.f32 %v146
    %v152 = vsel %vm151, %v146, %v150
    %v153 = vmul.f32 %v96, %v152
    %v154 = vmul.f32 %v103, %v152
    %v155 = vmul.f32 %v110, %v152
    %v156 = vmul.f32 %v117, %v152
    %v157 = vmul.f32 %v124, %v152
    %v158 = vmul.f32 %v131, %v152
    %v159 = vmul.f32 %v138, %v152
    %v160 = vmul.f32 %v145, %v152
    %161 = vst [vmem:[#allocation1] ss:$4 sm:$0xff] %v64
    %s162 = scalar_lea.vmem [#allocation1], 32
    %163 = vst [vmem:[%s162] ss:$4 sm:$0xff] %v65
    %v164 = vld.sshfl [vmem:[#allocation1] sm:$0xff pattern:$0x73625140]
    %v165 = vld.sshfl [vmem:[#allocation1 + $0x8] sm:$0xff pattern:$0x73625140]
    %v166 = vld.sshfl [vmem:[#allocation1 + $0x10] sm:$0xff pattern:$0x73625140]
    %v167 = vld.sshfl [vmem:[#allocation1 + $0x18] sm:$0xff pattern:$0x73625140]
    %v168 = vld.sshfl [vmem:[#allocation1 + $0x20] sm:$0xff pattern:$0x73625140]
    %v169 = vld.sshfl [vmem:[#allocation1 + $0x28] sm:$0xff pattern:$0x73625140]
    %v170 = vld.sshfl [vmem:[#allocation1 + $0x30] sm:$0xff pattern:$0x73625140]
    %v171 = vld.sshfl [vmem:[#allocation1 + $0x38] sm:$0xff pattern:$0x73625140]
    %v180 = vsub.f32 %v153, %v164
    %v181 = vsub.f32 %v154, %v165
    %v182 = vsub.f32 %v155, %v166
    %v183 = vsub.f32 %v156, %v167
    %v184 = vsub.f32 %v157, %v168
    %v185 = vsub.f32 %v158, %v169
    %v186 = vsub.f32 %v159, %v170
    %v187 = vsub.f32 %v160, %v171
    %190 = vst [vmem:[#allocation1] ss:$4 sm:$0xff] %v66
    %s191 = scalar_lea.vmem [#allocation1], 32
    %192 = vst [vmem:[%s191] ss:$4 sm:$0xff] %v67
    %v193 = vld.sshfl [vmem:[#allocation1] sm:$0xff pattern:$0x73625140]
    %v194 = vld.sshfl [vmem:[#allocation1 + $0x8] sm:$0xff pattern:$0x73625140]
    %v195 = vld.sshfl [vmem:[#allocation1 + $0x10] sm:$0xff pattern:$0x73625140]
    %v196 = vld.sshfl [vmem:[#allocation1 + $0x18] sm:$0xff pattern:$0x73625140]
    %v197 = vld.sshfl [vmem:[#allocation1 + $0x20] sm:$0xff pattern:$0x73625140]
    %v198 = vld.sshfl [vmem:[#allocation1 + $0x28] sm:$0xff pattern:$0x73625140]
    %v199 = vld.sshfl [vmem:[#allocation1 + $0x30] sm:$0xff pattern:$0x73625140]
    %v200 = vld.sshfl [vmem:[#allocation1 + $0x38] sm:$0xff pattern:$0x73625140]
    %v209 = vsel %vm89, %v193, 0.0
    %v210 = vrot.slane %v209, 4
    %v211 = vadd.f32 %v209, %v210
    %v212 = vrot.slane %v211, 2
    %v213 = vadd.f32 %v211, %v212
    %v214 = vrot.slane %v213, 1
    %v215 = vadd.f32 %v213, %v214
    %v216 = vsel %vm89, %v194, 0.0
    %v217 = vrot.slane %v216, 4
    %v218 = vadd.f32 %v216, %v217
    %v219 = vrot.slane %v218, 2
    %v220 = vadd.f32 %v218, %v219
    %v221 = vrot.slane %v220, 1
    %v222 = vadd.f32 %v220, %v221
    %v223 = vsel %vm89, %v195, 0.0
    %v224 = vrot.slane %v223, 4
    %v225 = vadd.f32 %v223, %v224
    %v226 = vrot.slane %v225, 2
    %v227 = vadd.f32 %v225, %v226
    %v228 = vrot.slane %v227, 1
    %v229 = vadd.f32 %v227, %v228
    %v230 = vsel %vm89, %v196, 0.0
    %v231 = vrot.slane %v230, 4
    %v232 = vadd.f32 %v230, %v231
    %v233 = vrot.slane %v232, 2
    %v234 = vadd.f32 %v232, %v233
    %v235 = vrot.slane %v234, 1
    %v236 = vadd.f32 %v234, %v235
    %v237 = vsel %vm89, %v197, 0.0
    %v238 = vrot.slane %v237, 4
    %v239 = vadd.f32 %v237, %v238
    %v240 = vrot.slane %v239, 2
    %v241 = vadd.f32 %v239, %v240
    %v242 = vrot.slane %v241, 1
    %v243 = vadd.f32 %v241, %v242
    %v244 = vsel %vm89, %v198, 0.0
    %v245 = vrot.slane %v244, 4
    %v246 = vadd.f32 %v244, %v245
    %v247 = vrot.slane %v246, 2
    %v248 = vadd.f32 %v246, %v247
    %v249 = vrot.slane %v248, 1
    %v250 = vadd.f32 %v248, %v249
    %v251 = vsel %vm89, %v199, 0.0
    %v252 = vrot.slane %v251, 4
    %v253 = vadd.f32 %v251, %v252
    %v254 = vrot.slane %v253, 2
    %v255 = vadd.f32 %v253, %v254
    %v256 = vrot.slane %v255, 1
    %v257 = vadd.f32 %v255, %v256
    %v258 = vsel %vm89, %v200, 0.0
    %v259 = vrot.slane %v258, 4
    %v260 = vadd.f32 %v258, %v259
    %v261 = vrot.slane %v260, 2
    %v262 = vadd.f32 %v260, %v261
    %v263 = vrot.slane %v262, 1
    %v264 = vadd.f32 %v262, %v263
    %v265 = vmul.f32 %v215, %v152
    %v266 = vmul.f32 %v222, %v152
    %v267 = vmul.f32 %v229, %v152
    %v268 = vmul.f32 %v236, %v152
    %v269 = vmul.f32 %v243, %v152
    %v270 = vmul.f32 %v250, %v152
    %v271 = vmul.f32 %v257, %v152
    %v272 = vmul.f32 %v264, %v152
    %273 = vst [vmem:[#allocation1] ss:$4 sm:$0xff] %v66
    %s274 = scalar_lea.vmem [#allocation1], 32
    %275 = vst [vmem:[%s274] ss:$4 sm:$0xff] %v67
    %v276 = vld.sshfl [vmem:[#allocation1] sm:$0xff pattern:$0x73625140]
    %v277 = vld.sshfl [vmem:[#allocation1 + $0x8] sm:$0xff pattern:$0x73625140]
    %v278 = vld.sshfl [vmem:[#allocation1 + $0x10] sm:$0xff pattern:$0x73625140]
    %v279 = vld.sshfl [vmem:[#allocation1 + $0x18] sm:$0xff pattern:$0x73625140]
    %v280 = vld.sshfl [vmem:[#allocation1 + $0x20] sm:$0xff pattern:$0x73625140]
    %v281 = vld.sshfl [vmem:[#allocation1 + $0x28] sm:$0xff pattern:$0x73625140]
    %v282 = vld.sshfl [vmem:[#allocation1 + $0x30] sm:$0xff pattern:$0x73625140]
    %v283 = vld.sshfl [vmem:[#allocation1 + $0x38] sm:$0xff pattern:$0x73625140]
    %v292 = vsub.f32 %v265, %v276
    %v293 = vsub.f32 %v266, %v277
    %v294 = vsub.f32 %v267, %v278
    %v295 = vsub.f32 %v268, %v279
    %v296 = vsub.f32 %v269, %v280
    %v297 = vsub.f32 %v270, %v281
    %v298 = vsub.f32 %v271, %v282
    %v299 = vsub.f32 %v272, %v283
    %v300 = vld [vmem:[#allocation7] sm:$0x3]
    %301 = vmatpush.xpose.msra.mxu0 0.0
    %302 = vmatpush.xpose.msra.mxu0 0.0
    %303 = vmatpush.xpose.msra.mxu0 0.0
    %304 = vmatpush.xpose.msra.mxu0 0.0
    %305 = vmatpush.xpose.msra.mxu0 0.0
    %306 = vmatpush.xpose.msra.mxu0 0.0
    %307 = vmatpush.xpose.msra.mxu0 0.0
    %308 = vmatpush.xpose.msra.mxu0 0.0
    %309 = vmatpush.xpose.msra.mxu0 0.0
    %310 = vmatpush.xpose.msra.mxu0 0.0
    %311 = vmatpush.xpose.msra.mxu0 0.0
    %312 = vmatpush.xpose.msra.mxu0 0.0
    %313 = vmatpush.xpose.msra.mxu0 0.0
    %314 = vmatpush.xpose.msra.mxu0 0.0
    %315 = vmatpush.xpose.msra.mxu0 0.0
    %316 = vmatpush.xpose.msra.mxu0 %v180
    %317 = vmatmul.f32.gmra.mxu0 %v180
    %v318 = vpop.f32.mrf.mxu0
    %v319 = vadd.f32 0.0, %v318
    %320 = vdwg.mxu0
    %321 = vmatpush.xpose.msra.mxu0 0.0
    %322 = vmatpush.xpose.msra.mxu0 0.0
    %323 = vmatpush.xpose.msra.mxu0 0.0
    %324 = vmatpush.xpose.msra.mxu0 0.0
    %325 = vmatpush.xpose.msra.mxu0 0.0
    %326 = vmatpush.xpose.msra.mxu0 0.0
    %327 = vmatpush.xpose.msra.mxu0 0.0
    %328 = vmatpush.xpose.msra.mxu0 0.0
    %329 = vmatpush.xpose.msra.mxu0 0.0
    %330 = vmatpush.xpose.msra.mxu0 0.0
    %331 = vmatpush.xpose.msra.mxu0 0.0
    %332 = vmatpush.xpose.msra.mxu0 0.0
    %333 = vmatpush.xpose.msra.mxu0 0.0
    %334 = vmatpush.xpose.msra.mxu0 0.0
    %335 = vmatpush.xpose.msra.mxu0 0.0
    %336 = vmatpush.xpose.msra.mxu0 %v181
    %337 = vmatmul.f32.gmra.mxu0 %v181
    %v338 = vpop.f32.mrf.mxu0
    %v339 = vadd.f32 %v319, %v338
    %340 = vdwg.mxu0
    %341 = vmatpush.xpose.msra.mxu0 0.0
    %342 = vmatpush.xpose.msra.mxu0 0.0
    %343 = vmatpush.xpose.msra.mxu0 0.0
    %344 = vmatpush.xpose.msra.mxu0 0.0
    %345 = vmatpush.xpose.msra.mxu0 0.0
    %346 = vmatpush.xpose.msra.mxu0 0.0
    %347 = vmatpush.xpose.msra.mxu0 0.0
    %348 = vmatpush.xpose.msra.mxu0 0.0
    %349 = vmatpush.xpose.msra.mxu0 0.0
    %350 = vmatpush.xpose.msra.mxu0 0.0
    %351 = vmatpush.xpose.msra.mxu0 0.0
    %352 = vmatpush.xpose.msra.mxu0 0.0
    %353 = vmatpush.xpose.msra.mxu0 0.0
    %354 = vmatpush.xpose.msra.mxu0 0.0
    %355 = vmatpush.xpose.msra.mxu0 0.0
    %356 = vmatpush.xpose.msra.mxu0 %v182
    %357 = vmatmul.f32.gmra.mxu0 %v182
    %v358 = vpop.f32.mrf.mxu0
    %v359 = vadd.f32 %v339, %v358
    %360 = vdwg.mxu0
    %361 = vmatpush.xpose.msra.mxu0 0.0
    %362 = vmatpush.xpose.msra.mxu0 0.0
    %363 = vmatpush.xpose.msra.mxu0 0.0
    %364 = vmatpush.xpose.msra.mxu0 0.0
    %365 = vmatpush.xpose.msra.mxu0 0.0
    %366 = vmatpush.xpose.msra.mxu0 0.0
    %367 = vmatpush.xpose.msra.mxu0 0.0
    %368 = vmatpush.xpose.msra.mxu0 0.0
    %369 = vmatpush.xpose.msra.mxu0 0.0
    %370 = vmatpush.xpose.msra.mxu0 0.0
    %371 = vmatpush.xpose.msra.mxu0 0.0
    %372 = vmatpush.xpose.msra.mxu0 0.0
    %373 = vmatpush.xpose.msra.mxu0 0.0
    %374 = vmatpush.xpose.msra.mxu0 0.0
    %375 = vmatpush.xpose.msra.mxu0 0.0
    %376 = vmatpush.xpose.msra.mxu0 %v183
    %377 = vmatmul.f32.gmra.mxu0 %v183
    %v378 = vpop.f32.mrf.mxu0
    %v379 = vadd.f32 %v359, %v378
    %380 = vdwg.mxu0
    %381 = vmatpush.xpose.msra.mxu0 0.0
    %382 = vmatpush.xpose.msra.mxu0 0.0
    %383 = vmatpush.xpose.msra.mxu0 0.0
    %384 = vmatpush.xpose.msra.mxu0 0.0
    %385 = vmatpush.xpose.msra.mxu0 0.0
    %386 = vmatpush.xpose.msra.mxu0 0.0
    %387 = vmatpush.xpose.msra.mxu0 0.0
    %388 = vmatpush.xpose.msra.mxu0 0.0
    %389 = vmatpush.xpose.msra.mxu0 0.0
    %390 = vmatpush.xpose.msra.mxu0 0.0
    %391 = vmatpush.xpose.msra.mxu0 0.0
    %392 = vmatpush.xpose.msra.mxu0 0.0
    %393 = vmatpush.xpose.msra.mxu0 0.0
    %394 = vmatpush.xpose.msra.mxu0 0.0
    %395 = vmatpush.xpose.msra.mxu0 0.0
    %396 = vmatpush.xpose.msra.mxu0 %v184
    %397 = vmatmul.f32.gmra.mxu0 %v184
    %v398 = vpop.f32.mrf.mxu0
    %v399 = vadd.f32 %v379, %v398
    %400 = vdwg.mxu0
    %401 = vmatpush.xpose.msra.mxu0 0.0
    %402 = vmatpush.xpose.msra.mxu0 0.0
    %403 = vmatpush.xpose.msra.mxu0 0.0
    %404 = vmatpush.xpose.msra.mxu0 0.0
    %405 = vmatpush.xpose.msra.mxu0 0.0
    %406 = vmatpush.xpose.msra.mxu0 0.0
    %407 = vmatpush.xpose.msra.mxu0 0.0
    %408 = vmatpush.xpose.msra.mxu0 0.0
    %409 = vmatpush.xpose.msra.mxu0 0.0
    %410 = vmatpush.xpose.msra.mxu0 0.0
    %411 = vmatpush.xpose.msra.mxu0 0.0
    %412 = vmatpush.xpose.msra.mxu0 0.0
    %413 = vmatpush.xpose.msra.mxu0 0.0
    %414 = vmatpush.xpose.msra.mxu0 0.0
    %415 = vmatpush.xpose.msra.mxu0 0.0
    %416 = vmatpush.xpose.msra.mxu0 %v185
    %417 = vmatmul.f32.gmra.mxu0 %v185
    %v418 = vpop.f32.mrf.mxu0
    %v419 = vadd.f32 %v399, %v418
    %420 = vdwg.mxu0
    %421 = vmatpush.xpose.msra.mxu0 0.0
    %422 = vmatpush.xpose.msra.mxu0 0.0
    %423 = vmatpush.xpose.msra.mxu0 0.0
    %424 = vmatpush.xpose.msra.mxu0 0.0
    %425 = vmatpush.xpose.msra.mxu0 0.0
    %426 = vmatpush.xpose.msra.mxu0 0.0
    %427 = vmatpush.xpose.msra.mxu0 0.0
    %428 = vmatpush.xpose.msra.mxu0 0.0
    %429 = vmatpush.xpose.msra.mxu0 0.0
    %430 = vmatpush.xpose.msra.mxu0 0.0
    %431 = vmatpush.xpose.msra.mxu0 0.0
    %432 = vmatpush.xpose.msra.mxu0 0.0
    %433 = vmatpush.xpose.msra.mxu0 0.0
    %434 = vmatpush.xpose.msra.mxu0 0.0
    %435 = vmatpush.xpose.msra.mxu0 0.0
    %436 = vmatpush.xpose.msra.mxu0 %v186
    %437 = vmatmul.f32.gmra.mxu0 %v186
    %v438 = vpop.f32.mrf.mxu0
    %v439 = vadd.f32 %v419, %v438
    %440 = vdwg.mxu0
    %441 = vmatpush.xpose.msra.mxu0 0.0
    %442 = vmatpush.xpose.msra.mxu0 0.0
    %443 = vmatpush.xpose.msra.mxu0 0.0
    %444 = vmatpush.xpose.msra.mxu0 0.0
    %445 = vmatpush.xpose.msra.mxu0 0.0
    %446 = vmatpush.xpose.msra.mxu0 0.0
    %447 = vmatpush.xpose.msra.mxu0 0.0
    %448 = vmatpush.xpose.msra.mxu0 0.0
    %449 = vmatpush.xpose.msra.mxu0 0.0
    %450 = vmatpush.xpose.msra.mxu0 0.0
    %451 = vmatpush.xpose.msra.mxu0 0.0
    %452 = vmatpush.xpose.msra.mxu0 0.0
    %453 = vmatpush.xpose.msra.mxu0 0.0
    %454 = vmatpush.xpose.msra.mxu0 0.0
    %455 = vmatpush.xpose.msra.mxu0 0.0
    %456 = vmatpush.xpose.msra.mxu0 %v187
    %457 = vmatmul.f32.gmra.mxu0 %v187
    %v458 = vpop.f32.mrf.mxu0
    %v459 = vadd.f32 %v439, %v458
    %460 = vdwg.mxu0
    %v461 = vadd.f32 %v300, %v459
    %vm462 = vcmask 9216
    %463 = vst.msk [vmem:[#allocation7] sm:$0x3] %vm462, %v461
    %v464 = vld [vmem:[#allocation8] sm:$0x3]
    %465 = vmatpush.xpose.msra.mxu0 0.0
    %466 = vmatpush.xpose.msra.mxu0 0.0
    %467 = vmatpush.xpose.msra.mxu0 0.0
    %468 = vmatpush.xpose.msra.mxu0 0.0
    %469 = vmatpush.xpose.msra.mxu0 0.0
    %470 = vmatpush.xpose.msra.mxu0 0.0
    %471 = vmatpush.xpose.msra.mxu0 0.0
    %472 = vmatpush.xpose.msra.mxu0 0.0
    %473 = vmatpush.xpose.msra.mxu0 0.0
    %474 = vmatpush.xpose.msra.mxu0 0.0
    %475 = vmatpush.xpose.msra.mxu0 0.0
    %476 = vmatpush.xpose.msra.mxu0 0.0
    %477 = vmatpush.xpose.msra.mxu0 0.0
    %478 = vmatpush.xpose.msra.mxu0 0.0
    %479 = vmatpush.xpose.msra.mxu0 0.0
    %480 = vmatpush.xpose.msra.mxu0 %v292
    %481 = vmatmul.f32.gmra.mxu0 %v292
    %v482 = vpop.f32.mrf.mxu0
    %v483 = vadd.f32 0.0, %v482
    %484 = vdwg.mxu0
    %485 = vmatpush.xpose.msra.mxu0 0.0
    %486 = vmatpush.xpose.msra.mxu0 0.0
    %487 = vmatpush.xpose.msra.mxu0 0.0
    %488 = vmatpush.xpose.msra.mxu0 0.0
    %489 = vmatpush.xpose.msra.mxu0 0.0
    %490 = vmatpush.xpose.msra.mxu0 0.0
    %491 = vmatpush.xpose.msra.mxu0 0.0
    %492 = vmatpush.xpose.msra.mxu0 0.0
    %493 = vmatpush.xpose.msra.mxu0 0.0
    %494 = vmatpush.xpose.msra.mxu0 0.0
    %495 = vmatpush.xpose.msra.mxu0 0.0
    %496 = vmatpush.xpose.msra.mxu0 0.0
    %497 = vmatpush.xpose.msra.mxu0 0.0
    %498 = vmatpush.xpose.msra.mxu0 0.0
    %499 = vmatpush.xpose.msra.mxu0 0.0
    %500 = vmatpush.xpose.msra.mxu0 %v293
    %501 = vmatmul.f32.gmra.mxu0 %v293
    %v502 = vpop.f32.mrf.mxu0
    %v503 = vadd.f32 %v483, %v502
    %504 = vdwg.mxu0
    %505 = vmatpush.xpose.msra.mxu0 0.0
    %506 = vmatpush.xpose.msra.mxu0 0.0
    %507 = vmatpush.xpose.msra.mxu0 0.0
    %508 = vmatpush.xpose.msra.mxu0 0.0
    %509 = vmatpush.xpose.msra.mxu0 0.0
    %510 = vmatpush.xpose.msra.mxu0 0.0
    %511 = vmatpush.xpose.msra.mxu0 0.0
    %512 = vmatpush.xpose.msra.mxu0 0.0
    %513 = vmatpush.xpose.msra.mxu0 0.0
    %514 = vmatpush.xpose.msra.mxu0 0.0
    %515 = vmatpush.xpose.msra.mxu0 0.0
    %516 = vmatpush.xpose.msra.mxu0 0.0
    %517 = vmatpush.xpose.msra.mxu0 0.0
    %518 = vmatpush.xpose.msra.mxu0 0.0
    %519 = vmatpush.xpose.msra.mxu0 0.0
    %520 = vmatpush.xpose.msra.mxu0 %v294
    %521 = vmatmul.f32.gmra.mxu0 %v294
    %v522 = vpop.f32.mrf.mxu0
    %v523 = vadd.f32 %v503, %v522
    %524 = vdwg.mxu0
    %525 = vmatpush.xpose.msra.mxu0 0.0
    %526 = vmatpush.xpose.msra.mxu0 0.0
    %527 = vmatpush.xpose.msra.mxu0 0.0
    %528 = vmatpush.xpose.msra.mxu0 0.0
    %529 = vmatpush.xpose.msra.mxu0 0.0
    %530 = vmatpush.xpose.msra.mxu0 0.0
    %531 = vmatpush.xpose.msra.mxu0 0.0
    %532 = vmatpush.xpose.msra.mxu0 0.0
    %533 = vmatpush.xpose.msra.mxu0 0.0
    %534 = vmatpush.xpose.msra.mxu0 0.0
    %535 = vmatpush.xpose.msra.mxu0 0.0
    %536 = vmatpush.xpose.msra.mxu0 0.0
    %537 = vmatpush.xpose.msra.mxu0 0.0
    %538 = vmatpush.xpose.msra.mxu0 0.0
    %539 = vmatpush.xpose.msra.mxu0 0.0
    %540 = vmatpush.xpose.msra.mxu0 %v295
    %541 = vmatmul.f32.gmra.mxu0 %v295
    %v542 = vpop.f32.mrf.mxu0
    %v543 = vadd.f32 %v523, %v542
    %544 = vdwg.mxu0
    %545 = vmatpush.xpose.msra.mxu0 0.0
    %546 = vmatpush.xpose.msra.mxu0 0.0
    %547 = vmatpush.xpose.msra.mxu0 0.0
    %548 = vmatpush.xpose.msra.mxu0 0.0
    %549 = vmatpush.xpose.msra.mxu0 0.0
    %550 = vmatpush.xpose.msra.mxu0 0.0
    %551 = vmatpush.xpose.msra.mxu0 0.0
    %552 = vmatpush.xpose.msra.mxu0 0.0
    %553 = vmatpush.xpose.msra.mxu0 0.0
    %554 = vmatpush.xpose.msra.mxu0 0.0
    %555 = vmatpush.xpose.msra.mxu0 0.0
    %556 = vmatpush.xpose.msra.mxu0 0.0
    %557 = vmatpush.xpose.msra.mxu0 0.0
    %558 = vmatpush.xpose.msra.mxu0 0.0
    %559 = vmatpush.xpose.msra.mxu0 0.0
    %560 = vmatpush.xpose.msra.mxu0 %v296
    %561 = vmatmul.f32.gmra.mxu0 %v296
    %v562 = vpop.f32.mrf.mxu0
    %v563 = vadd.f32 %v543, %v562
    %564 = vdwg.mxu0
    %565 = vmatpush.xpose.msra.mxu0 0.0
    %566 = vmatpush.xpose.msra.mxu0 0.0
    %567 = vmatpush.xpose.msra.mxu0 0.0
    %568 = vmatpush.xpose.msra.mxu0 0.0
    %569 = vmatpush.xpose.msra.mxu0 0.0
    %570 = vmatpush.xpose.msra.mxu0 0.0
    %571 = vmatpush.xpose.msra.mxu0 0.0
    %572 = vmatpush.xpose.msra.mxu0 0.0
    %573 = vmatpush.xpose.msra.mxu0 0.0
    %574 = vmatpush.xpose.msra.mxu0 0.0
    %575 = vmatpush.xpose.msra.mxu0 0.0
    %576 = vmatpush.xpose.msra.mxu0 0.0
    %577 = vmatpush.xpose.msra.mxu0 0.0
    %578 = vmatpush.xpose.msra.mxu0 0.0
    %579 = vmatpush.xpose.msra.mxu0 0.0
    %580 = vmatpush.xpose.msra.mxu0 %v297
    %581 = vmatmul.f32.gmra.mxu0 %v297
    %v582 = vpop.f32.mrf.mxu0
    %v583 = vadd.f32 %v563, %v582
    %584 = vdwg.mxu0
    %585 = vmatpush.xpose.msra.mxu0 0.0
    %586 = vmatpush.xpose.msra.mxu0 0.0
    %587 = vmatpush.xpose.msra.mxu0 0.0
    %588 = vmatpush.xpose.msra.mxu0 0.0
    %589 = vmatpush.xpose.msra.mxu0 0.0
    %590 = vmatpush.xpose.msra.mxu0 0.0
    %591 = vmatpush.xpose.msra.mxu0 0.0
    %592 = vmatpush.xpose.msra.mxu0 0.0
    %593 = vmatpush.xpose.msra.mxu0 0.0
    %594 = vmatpush.xpose.msra.mxu0 0.0
    %595 = vmatpush.xpose.msra.mxu0 0.0
    %596 = vmatpush.xpose.msra.mxu0 0.0
    %597 = vmatpush.xpose.msra.mxu0 0.0
    %598 = vmatpush.xpose.msra.mxu0 0.0
    %599 = vmatpush.xpose.msra.mxu0 0.0
    %600 = vmatpush.xpose.msra.mxu0 %v298
    %601 = vmatmul.f32.gmra.mxu0 %v298
    %v602 = vpop.f32.mrf.mxu0
    %v603 = vadd.f32 %v583, %v602
    %604 = vdwg.mxu0
    %605 = vmatpush.xpose.msra.mxu0 0.0
    %606 = vmatpush.xpose.msra.mxu0 0.0
    %607 = vmatpush.xpose.msra.mxu0 0.0
    %608 = vmatpush.xpose.msra.mxu0 0.0
    %609 = vmatpush.xpose.msra.mxu0 0.0
    %610 = vmatpush.xpose.msra.mxu0 0.0
    %611 = vmatpush.xpose.msra.mxu0 0.0
    %612 = vmatpush.xpose.msra.mxu0 0.0
    %613 = vmatpush.xpose.msra.mxu0 0.0
    %614 = vmatpush.xpose.msra.mxu0 0.0
    %615 = vmatpush.xpose.msra.mxu0 0.0
    %616 = vmatpush.xpose.msra.mxu0 0.0
    %617 = vmatpush.xpose.msra.mxu0 0.0
    %618 = vmatpush.xpose.msra.mxu0 0.0
    %619 = vmatpush.xpose.msra.mxu0 0.0
    %620 = vmatpush.xpose.msra.mxu0 %v299
    %621 = vmatmul.f32.gmra.mxu0 %v299
    %v622 = vpop.f32.mrf.mxu0
    %v623 = vadd.f32 %v603, %v622
    %624 = vdwg.mxu0
    %v625 = vadd.f32 %v464, %v623
    %626 = vst.msk [vmem:[#allocation8] sm:$0x3] %vm462, %v625
    %v627 = vld [vmem:[#allocation10] sm:$0x3]
    %628 = vmatpush.xpose.msra.mxu0 0.0
    %629 = vmatpush.xpose.msra.mxu0 0.0
    %630 = vmatpush.xpose.msra.mxu0 0.0
    %631 = vmatpush.xpose.msra.mxu0 0.0
    %632 = vmatpush.xpose.msra.mxu0 0.0
    %633 = vmatpush.xpose.msra.mxu0 0.0
    %634 = vmatpush.xpose.msra.mxu0 0.0
    %635 = vmatpush.xpose.msra.mxu0 0.0
    %636 = vmatpush.xpose.msra.mxu0 0.0
    %637 = vmatpush.xpose.msra.mxu0 0.0
    %638 = vmatpush.xpose.msra.mxu0 0.0
    %639 = vmatpush.xpose.msra.mxu0 0.0
    %640 = vmatpush.xpose.msra.mxu0 0.0
    %641 = vmatpush.xpose.msra.mxu0 0.0
    %642 = vmatpush.xpose.msra.mxu0 0.0
    %643 = vmatpush.xpose.msra.mxu0 %v292
    %644 = vmatmul.f32.gmra.mxu0 %v180
    %v645 = vpop.f32.mrf.mxu0
    %v646 = vadd.f32 0.0, %v645
    %647 = vdwg.mxu0
    %648 = vmatpush.xpose.msra.mxu0 0.0
    %649 = vmatpush.xpose.msra.mxu0 0.0
    %650 = vmatpush.xpose.msra.mxu0 0.0
    %651 = vmatpush.xpose.msra.mxu0 0.0
    %652 = vmatpush.xpose.msra.mxu0 0.0
    %653 = vmatpush.xpose.msra.mxu0 0.0
    %654 = vmatpush.xpose.msra.mxu0 0.0
    %655 = vmatpush.xpose.msra.mxu0 0.0
    %656 = vmatpush.xpose.msra.mxu0 0.0
    %657 = vmatpush.xpose.msra.mxu0 0.0
    %658 = vmatpush.xpose.msra.mxu0 0.0
    %659 = vmatpush.xpose.msra.mxu0 0.0
    %660 = vmatpush.xpose.msra.mxu0 0.0
    %661 = vmatpush.xpose.msra.mxu0 0.0
    %662 = vmatpush.xpose.msra.mxu0 0.0
    %663 = vmatpush.xpose.msra.mxu0 %v293
    %664 = vmatmul.f32.gmra.mxu0 %v181
    %v665 = vpop.f32.mrf.mxu0
    %v666 = vadd.f32 %v646, %v665
    %667 = vdwg.mxu0
    %668 = vmatpush.xpose.msra.mxu0 0.0
    %669 = vmatpush.xpose.msra.mxu0 0.0
    %670 = vmatpush.xpose.msra.mxu0 0.0
    %671 = vmatpush.xpose.msra.mxu0 0.0
    %672 = vmatpush.xpose.msra.mxu0 0.0
    %673 = vmatpush.xpose.msra.mxu0 0.0
    %674 = vmatpush.xpose.msra.mxu0 0.0
    %675 = vmatpush.xpose.msra.mxu0 0.0
    %676 = vmatpush.xpose.msra.mxu0 0.0
    %677 = vmatpush.xpose.msra.mxu0 0.0
    %678 = vmatpush.xpose.msra.mxu0 0.0
    %679 = vmatpush.xpose.msra.mxu0 0.0
    %680 = vmatpush.xpose.msra.mxu0 0.0
    %681 = vmatpush.xpose.msra.mxu0 0.0
    %682 = vmatpush.xpose.msra.mxu0 0.0
    %683 = vmatpush.xpose.msra.mxu0 %v294
    %684 = vmatmul.f32.gmra.mxu0 %v182
    %v685 = vpop.f32.mrf.mxu0
    %v686 = vadd.f32 %v666, %v685
    %687 = vdwg.mxu0
    %688 = vmatpush.xpose.msra.mxu0 0.0
    %689 = vmatpush.xpose.msra.mxu0 0.0
    %690 = vmatpush.xpose.msra.mxu0 0.0
    %691 = vmatpush.xpose.msra.mxu0 0.0
    %692 = vmatpush.xpose.msra.mxu0 0.0
    %693 = vmatpush.xpose.msra.mxu0 0.0
    %694 = vmatpush.xpose.msra.mxu0 0.0
    %695 = vmatpush.xpose.msra.mxu0 0.0
    %696 = vmatpush.xpose.msra.mxu0 0.0
    %697 = vmatpush.xpose.msra.mxu0 0.0
    %698 = vmatpush.xpose.msra.mxu0 0.0
    %699 = vmatpush.xpose.msra.mxu0 0.0
    %700 = vmatpush.xpose.msra.mxu0 0.0
    %701 = vmatpush.xpose.msra.mxu0 0.0
    %702 = vmatpush.xpose.msra.mxu0 0.0
    %703 = vmatpush.xpose.msra.mxu0 %v295
    %704 = vmatmul.f32.gmra.mxu0 %v183
    %v705 = vpop.f32.mrf.mxu0
    %v706 = vadd.f32 %v686, %v705
    %707 = vdwg.mxu0
    %708 = vmatpush.xpose.msra.mxu0 0.0
    %709 = vmatpush.xpose.msra.mxu0 0.0
    %710 = vmatpush.xpose.msra.mxu0 0.0
    %711 = vmatpush.xpose.msra.mxu0 0.0
    %712 = vmatpush.xpose.msra.mxu0 0.0
    %713 = vmatpush.xpose.msra.mxu0 0.0
    %714 = vmatpush.xpose.msra.mxu0 0.0
    %715 = vmatpush.xpose.msra.mxu0 0.0
    %716 = vmatpush.xpose.msra.mxu0 0.0
    %717 = vmatpush.xpose.msra.mxu0 0.0
    %718 = vmatpush.xpose.msra.mxu0 0.0
    %719 = vmatpush.xpose.msra.mxu0 0.0
    %720 = vmatpush.xpose.msra.mxu0 0.0
    %721 = vmatpush.xpose.msra.mxu0 0.0
    %722 = vmatpush.xpose.msra.mxu0 0.0
    %723 = vmatpush.xpose.msra.mxu0 %v296
    %724 = vmatmul.f32.gmra.mxu0 %v184
    %v725 = vpop.f32.mrf.mxu0
    %v726 = vadd.f32 %v706, %v725
    %727 = vdwg.mxu0
    %728 = vmatpush.xpose.msra.mxu0 0.0
    %729 = vmatpush.xpose.msra.mxu0 0.0
    %730 = vmatpush.xpose.msra.mxu0 0.0
    %731 = vmatpush.xpose.msra.mxu0 0.0
    %732 = vmatpush.xpose.msra.mxu0 0.0
    %733 = vmatpush.xpose.msra.mxu0 0.0
    %734 = vmatpush.xpose.msra.mxu0 0.0
    %735 = vmatpush.xpose.msra.mxu0 0.0
    %736 = vmatpush.xpose.msra.mxu0 0.0
    %737 = vmatpush.xpose.msra.mxu0 0.0
    %738 = vmatpush.xpose.msra.mxu0 0.0
    %739 = vmatpush.xpose.msra.mxu0 0.0
    %740 = vmatpush.xpose.msra.mxu0 0.0
    %741 = vmatpush.xpose.msra.mxu0 0.0
    %742 = vmatpush.xpose.msra.mxu0 0.0
    %743 = vmatpush.xpose.msra.mxu0 %v297
    %744 = vmatmul.f32.gmra.mxu0 %v185
    %v745 = vpop.f32.mrf.mxu0
    %v746 = vadd.f32 %v726, %v745
    %747 = vdwg.mxu0
    %748 = vmatpush.xpose.msra.mxu0 0.0
    %749 = vmatpush.xpose.msra.mxu0 0.0
    %750 = vmatpush.xpose.msra.mxu0 0.0
    %751 = vmatpush.xpose.msra.mxu0 0.0
    %752 = vmatpush.xpose.msra.mxu0 0.0
    %753 = vmatpush.xpose.msra.mxu0 0.0
    %754 = vmatpush.xpose.msra.mxu0 0.0
    %755 = vmatpush.xpose.msra.mxu0 0.0
    %756 = vmatpush.xpose.msra.mxu0 0.0
    %757 = vmatpush.xpose.msra.mxu0 0.0
    %758 = vmatpush.xpose.msra.mxu0 0.0
    %759 = vmatpush.xpose.msra.mxu0 0.0
    %760 = vmatpush.xpose.msra.mxu0 0.0
    %761 = vmatpush.xpose.msra.mxu0 0.0
    %762 = vmatpush.xpose.msra.mxu0 0.0
    %763 = vmatpush.xpose.msra.mxu0 %v298
    %764 = vmatmul.f32.gmra.mxu0 %v186
    %v765 = vpop.f32.mrf.mxu0
    %v766 = vadd.f32 %v746, %v765
    %767 = vdwg.mxu0
    %768 = vmatpush.xpose.msra.mxu0 0.0
    %769 = vmatpush.xpose.msra.mxu0 0.0
    %770 = vmatpush.xpose.msra.mxu0 0.0
    %771 = vmatpush.xpose.msra.mxu0 0.0
    %772 = vmatpush.xpose.msra.mxu0 0.0
    %773 = vmatpush.xpose.msra.mxu0 0.0
    %774 = vmatpush.xpose.msra.mxu0 0.0
    %775 = vmatpush.xpose.msra.mxu0 0.0
    %776 = vmatpush.xpose.msra.mxu0 0.0
    %777 = vmatpush.xpose.msra.mxu0 0.0
    %778 = vmatpush.xpose.msra.mxu0 0.0
    %779 = vmatpush.xpose.msra.mxu0 0.0
    %780 = vmatpush.xpose.msra.mxu0 0.0
    %781 = vmatpush.xpose.msra.mxu0 0.0
    %782 = vmatpush.xpose.msra.mxu0 0.0
    %783 = vmatpush.xpose.msra.mxu0 %v299
    %784 = vmatmul.f32.gmra.mxu0 %v187
    %v785 = vpop.f32.mrf.mxu0
    %v786 = vadd.f32 %v766, %v785
    %787 = vdwg.mxu0
    %v788 = vadd.f32 %v627, %v786
    %789 = vst.msk [vmem:[#allocation10] sm:$0x3] %vm462, %v788
    // Predicated region
    $region22: #{tpu_custom_call.1} parent=1 // pred_check
      _
    $region23: #{tpu_custom_call.1} parent=1 // pred_check_branch
      %791 = sbr.rel (0) target = $region25
    $region24: #{tpu_custom_call.1} parent=1 // pred_region
      %793 = vsyncadd [#allocation4], 0
      %s795 = sshll.u32 [#allocation7], 4
      %s796 = int_to_ptr.vmem [resolvable:$true] %s795
      %s797 = sshll.u32 %s2, 4
      %s798 = int_to_ptr.hbm [resolvable:$true] %s797
      %800 = dma.vmem_to_hbm [thread:$0]  %s796, 32, %s798, [#allocation4]
    $region25: #{tpu_custom_call.1} parent=1 // pred_fallthru
      _
    // Predicated region
    $region26: #{tpu_custom_call.1} parent=1 // pred_check
      _
    $region27: #{tpu_custom_call.1} parent=1 // pred_check_branch
      %802 = sbr.rel (0) target = $region29
    $region28: #{tpu_custom_call.1} parent=1 // pred_region
      %804 = vsyncadd [#allocation9], 0
      %s806 = sshll.u32 [#allocation8], 4
      %s807 = int_to_ptr.vmem [resolvable:$true] %s806
      %s808 = sshll.u32 %s3, 4
      %s809 = int_to_ptr.hbm [resolvable:$true] %s808
      %811 = dma.vmem_to_hbm [thread:$0]  %s807, 32, %s809, [#allocation9]
    $region29: #{tpu_custom_call.1} parent=1 // pred_fallthru
      _
    // Predicated region
    $region30: #{tpu_custom_call.1} parent=1 // pred_check
      _
    $region31: #{tpu_custom_call.1} parent=1 // pred_check_branch
      %813 = sbr.rel (0) target = $region33
    $region32: #{tpu_custom_call.1} parent=1 // pred_region
      %815 = vsyncadd [#allocation9], 0
      %s817 = sshll.u32 [#allocation10], 4
      %s818 = int_to_ptr.vmem [resolvable:$true] %s817
      %s819 = sshll.u32 %s4, 4
      %s820 = int_to_ptr.hbm [resolvable:$true] %s819
      %822 = dma.vmem_to_hbm [thread:$0]  %s818, 32, %s820, [#allocation9]
    $region33: #{tpu_custom_call.1} parent=1 // pred_fallthru
      _
    // Predicated region
    $region34: #{tpu_custom_call.1} parent=1 // pred_check
      _
    $region35: #{tpu_custom_call.1} parent=1 // pred_check_branch
      %824 = sbr.rel (0) target = $region37
    $region36: #{tpu_custom_call.1} parent=1 // pred_region
      %826 = dma.done [#allocation4], 32
    $region37: #{tpu_custom_call.1} parent=1 // pred_fallthru
      _
    // Predicated region
    $region38: #{tpu_custom_call.1} parent=1 // pred_check
      _
    $region39: #{tpu_custom_call.1} parent=1 // pred_check_branch
      %828 = sbr.rel (0) target = $region41
    $region40: #{tpu_custom_call.1} parent=1 // pred_region
      %830 = dma.done [#allocation9], 32
    $region41: #{tpu_custom_call.1} parent=1 // pred_fallthru
      _
    // Predicated region
    $region42: #{tpu_custom_call.1} parent=1 // pred_check
      _
    $region43: #{tpu_custom_call.1} parent=1 // pred_check_branch
      %832 = sbr.rel (0) target = $region45
    $region44: #{tpu_custom_call.1} parent=1 // pred_region
      %834 = dma.done [#allocation9], 32
    $region45: #{tpu_custom_call.1} parent=1 // pred_fallthru
      _
    %835 = vsyncpa [#allocation3], 1
    %836 = vsyncpa [#allocation6], 1
    %837 = vsyncpa [#allocation4], 1
    %838 = vsyncpa [#allocation9], 1

</llo_original>
